<compile_context>
chip_gen: v6e
topology: v6e:2x2x1
jax: 0.10.0
libtpu: 0.0.40
codegen_flags: <defaults>
</compile_context>

<pallas_src>
import functools

import jax
import jax.numpy as jnp
from jax import lax
from jax.experimental import pallas as pl
from jax.experimental.pallas import tpu as pltpu


# ---------------------------------------------------------------------------
# Kernels
# ---------------------------------------------------------------------------

def _sigmoid(z):
    return 1.0 / (1.0 + jnp.exp(-z))


def _temporal_block_kernel(x_ref, w1_ref, b1_ref, w2_ref, b2_ref, *rest,
                           kernel_size, dilation, has_downsample):
    """One fused TemporalBlock for a single batch element.

    x_ref: (1, L, C_in); w*_ref: (K, C_in*, C_out); b*_ref: (1, C_out)
    optional wd_ref: (C_in, C_out), bd_ref: (1, C_out); out_ref: (1, L, C_out)
    """
    if has_downsample:
        wd_ref, bd_ref, out_ref = rest
    else:
        (out_ref,) = rest

    x = x_ref[0]                       # (L, C_in), f32
    L = x.shape[0]

    # 0/1 shift matrices for the causal (left-padded + chomped) taps:
    # (S_d @ v)[t] = v[t - d], with zero fill for t < d.  Built once per kernel
    # from iotas; applied on the MXU so no sublane shuffles are needed.
    shifts = sorted({(kernel_size - 1 - k) * dilation
                     for k in range(kernel_size)} - {0})
    t_idx = lax.broadcasted_iota(jnp.int32, (L, L), 0)
    s_idx = lax.broadcasted_iota(jnp.int32, (L, L), 1)
    shift_mats = {d: (t_idx - s_idx == d).astype(jnp.float32) for d in shifts}

    def causal_conv(inp, w_ref, b_ref):
        # inp: (L, C); w_ref: (K, C, C_out); b_ref: (1, C_out)
        acc = None
        for k in range(kernel_size):
            d = (kernel_size - 1 - k) * dilation
            xs = inp if d == 0 else jnp.dot(
                shift_mats[d], inp, preferred_element_type=jnp.float32)
            term = jnp.dot(xs, w_ref[k], preferred_element_type=jnp.float32)
            acc = term if acc is None else acc + term
        return acc + b_ref[...]

    # conv1 -> chomp -> ReLU -> dropout(id) -> conv2 -> chomp -> ReLU -> dropout(id)
    h = jnp.maximum(causal_conv(x, w1_ref, b1_ref), 0.0)
    h = jnp.maximum(causal_conv(h, w2_ref, b2_ref), 0.0)

    # residual branch (1x1 conv when channel counts differ)
    if has_downsample:
        res = jnp.dot(x, wd_ref[...],
                      preferred_element_type=jnp.float32) + bd_ref[...]
    else:
        res = x

    out_ref[0] = jnp.maximum(h + res, 0.0)


def _head_kernel(y_ref, w_ref, b_ref, out_ref):
    """Final Linear + Sigmoid for one batch element."""
    y = y_ref[0]                                                   # (L, C)
    z = jnp.dot(y, w_ref[...], preferred_element_type=jnp.float32) + b_ref[...]
    out_ref[0] = _sigmoid(z)


# ---------------------------------------------------------------------------
# Wrappers
# ---------------------------------------------------------------------------

def temporal_block(x, params, *, kernel_size, dilation):
    B, L, c_in = x.shape
    c_out = params["w1"].shape[2]
    has_ds = "wd" in params

    args = [x, params["w1"], params["b1"], params["w2"], params["b2"]]
    in_specs = [
        pl.BlockSpec((1, L, c_in), lambda b: (b, 0, 0)),
        pl.BlockSpec((kernel_size, c_in, c_out), lambda b: (0, 0, 0)),
        pl.BlockSpec((1, c_out), lambda b: (0, 0)),
        pl.BlockSpec((kernel_size, c_out, c_out), lambda b: (0, 0, 0)),
        pl.BlockSpec((1, c_out), lambda b: (0, 0)),
    ]
    if has_ds:
        args += [params["wd"], params["bd"]]
        in_specs += [
            pl.BlockSpec((c_in, c_out), lambda b: (0, 0)),
            pl.BlockSpec((1, c_out), lambda b: (0, 0)),
        ]

    kernel = functools.partial(
        _temporal_block_kernel,
        kernel_size=kernel_size, dilation=dilation, has_downsample=has_ds)

    return pl.pallas_call(
        kernel,
        out_shape=jax.ShapeDtypeStruct((B, L, c_out), jnp.float32),
        grid=(B,),
        in_specs=in_specs,
        out_specs=pl.BlockSpec((1, L, c_out), lambda b: (b, 0, 0)),
        compiler_params=pltpu.CompilerParams(dimension_semantics=("parallel",)),
    )(*args)


def tcn_head(y, w, b):
    B, L, c = y.shape
    o = w.shape[1]
    return pl.pallas_call(
        _head_kernel,
        out_shape=jax.ShapeDtypeStruct((B, L, o), jnp.float32),
        grid=(B,),
        in_specs=[
            pl.BlockSpec((1, L, c), lambda i: (i, 0, 0)),
            pl.BlockSpec((c, o), lambda i: (0, 0)),
            pl.BlockSpec((1, o), lambda i: (0, 0)),
        ],
        out_specs=pl.BlockSpec((1, L, o), lambda i: (i, 0, 0)),
        compiler_params=pltpu.CompilerParams(dimension_semantics=("parallel",)),
    )(y, w, b)


def tcn_forward(x, params, *, kernel_size):
    """x: (B, L, input_size) -> (B, L, output_size), matching TCN.forward."""
    y = x
    for i, blk in enumerate(params["blocks"]):
        y = temporal_block(y, blk, kernel_size=kernel_size, dilation=2 ** i)
    return tcn_head(y, params["w_lin"], params["b_lin"])


# ---------------------------------------------------------------------------
# Parameter construction (matches init_weights: conv weights ~ N(0, 0.1))
# ---------------------------------------------------------------------------

def init_tcn_params(key, input_size, output_size, num_channels, kernel_size):
    blocks = []
    c_prev = input_size
    for c_out in num_channels:
        key, k1, k2, k3, k4, k5, k6 = jax.random.split(key, 7)
        blk = {
            "w1": 0.1 * jax.random.normal(k1, (kernel_size, c_prev, c_out), jnp.float32),
            "b1": 0.1 * jax.random.normal(k2, (1, c_out), jnp.float32),
            "w2": 0.1 * jax.random.normal(k3, (kernel_size, c_out, c_out), jnp.float32),
            "b2": 0.1 * jax.random.normal(k4, (1, c_out), jnp.float32),
        }
        if c_prev != c_out:
            blk["wd"] = 0.1 * jax.random.normal(k5, (c_prev, c_out), jnp.float32)
            blk["bd"] = 0.1 * jax.random.normal(k6, (1, c_out), jnp.float32)
        blocks.append(blk)
        c_prev = c_out
    key, kl, kb = jax.random.split(key, 3)
    return {
        "blocks": blocks,
        "w_lin": 0.1 * jax.random.normal(kl, (c_prev, output_size), jnp.float32),
        "b_lin": 0.1 * jax.random.normal(kb, (1, output_size), jnp.float32),
    }


# ---------------------------------------------------------------------------
# Pure-JAX reference mirroring the PyTorch forward (for verification)
# ---------------------------------------------------------------------------

def _ref_causal_conv(x, w, b, dilation):
    K, _, _ = w.shape
    L = x.shape[1]
    pad = (K - 1) * dilation
    xp = jnp.pad(x, ((0, 0), (pad, 0), (0, 0)))
    y = None
    for k in range(K):
        term = jnp.einsum("blc,co->blo",
                          xp[:, k * dilation:k * dilation + L, :], w[k])
        y = term if y is None else y + term
    return y + b


def _ref_tcn(x, params, kernel_size):
    y = x
    for i, blk in enumerate(params["blocks"]):
        d = 2 ** i
        h = jax.nn.relu(_ref_causal_conv(y, blk["w1"], blk["b1"], d))
        h = jax.nn.relu(_ref_causal_conv(h, blk["w2"], blk["b2"], d))
        if "wd" in blk:
            res = jnp.einsum("blc,co->blo", y, blk["wd"]) + blk["bd"]
        else:
            res = y
        y = jax.nn.relu(h + res)
    z = jnp.einsum("blc,co->blo", y, params["w_lin"]) + params["b_lin"]
    return _sigmoid(z)


# ---------------------------------------------------------------------------
# Main
# ---------------------------------------------------------------------------

if __name__ == "__main__":
    key = jax.random.PRNGKey(0)
    B, L = 2, 16
    input_size, output_size = 4, 1
    num_channels = (8, 8, 16)     # exercises both residual paths (1x1 conv / identity)
    kernel_size = 2               # dropout=0.2 in the module; identity at inference

    key, kx, kp = jax.random.split(key, 3)
    x = jax.random.normal(kx, (B, L, input_size), dtype=jnp.float32)
    params = init_tcn_params(kp, input_size, output_size, num_channels, kernel_size)

    out = jax.block_until_ready(tcn_forward(x, params, kernel_size=kernel_size))
    ref = jax.block_until_ready(_ref_tcn(x, params, kernel_size))

    assert out.shape == (B, L, output_size), out.shape
    assert jnp.allclose(out, ref, atol=1e-5, rtol=1e-5), (out, ref)
    print("KERNEL_OK")
</pallas_src>

<mosaic_0001>
module attributes {stable_mosaic.version = 11 : i64} {
  func.func @_temporal_block_kernel(%arg0: i32, %arg1: memref<1x16x4xf32, #tpu.memory_space<vmem>>, %arg2: memref<2x4x8xf32, #tpu.memory_space<vmem>>, %arg3: memref<1x8xf32, #tpu.memory_space<vmem>>, %arg4: memref<2x8x8xf32, #tpu.memory_space<vmem>>, %arg5: memref<1x8xf32, #tpu.memory_space<vmem>>, %arg6: memref<4x8xf32, #tpu.memory_space<vmem>>, %arg7: memref<1x8xf32, #tpu.memory_space<vmem>>, %arg8: memref<1x16x8xf32, #tpu.memory_space<vmem>>) attributes {dimension_semantics = [#tpu.dimension_semantics<parallel>], iteration_bounds = array<i64: 2>, scalar_prefetch = 0 : i64, scratch_operands = 0 : i64, tpu.core_type = #tpu.core_type<tc>, window_params = [{transform_indices = @transform_0, window_bounds = array<i64: 1, 16, 4>}, {pipeline_mode = #tpu.pipeline_mode<synchronous>, transform_indices = @transform_1, window_bounds = array<i64: 2, 4, 8>}, {pipeline_mode = #tpu.pipeline_mode<synchronous>, transform_indices = @transform_2, window_bounds = array<i64: 1, 8>}, {pipeline_mode = #tpu.pipeline_mode<synchronous>, transform_indices = @transform_3, window_bounds = array<i64: 2, 8, 8>}, {pipeline_mode = #tpu.pipeline_mode<synchronous>, transform_indices = @transform_4, window_bounds = array<i64: 1, 8>}, {pipeline_mode = #tpu.pipeline_mode<synchronous>, transform_indices = @transform_5, window_bounds = array<i64: 4, 8>}, {pipeline_mode = #tpu.pipeline_mode<synchronous>, transform_indices = @transform_6, window_bounds = array<i64: 1, 8>}, {transform_indices = @transform_7, window_bounds = array<i64: 1, 16, 8>}]} {
    %c0 = arith.constant 0 : index
    %c0_0 = arith.constant 0 : index
    %c0_1 = arith.constant 0 : index
    %0 = vector.load %arg1[%c0, %c0_0, %c0_1] : memref<1x16x4xf32, #tpu.memory_space<vmem>>, vector<1x16x4xf32>
    %1 = vector.shape_cast %0 : vector<1x16x4xf32> to vector<16x4xf32>
    %2 = tpu.iota {dimensions = array<i32: 0>} : vector<16x16xi32>
    %3 = tpu.iota {dimensions = array<i32: 1>} : vector<16x16xi32>
    %4 = arith.subi %2, %3 : vector<16x16xi32>
    %c1_i32 = arith.constant 1 : i32
    %5 = vector.broadcast %c1_i32 : i32 to vector<16x16xi32>
    %6 = arith.cmpi eq, %4, %5 : vector<16x16xi32>
    %7 = arith.extui %6 : vector<16x16xi1> to vector<16x16xi32>
    %8 = arith.sitofp %7 : vector<16x16xi32> to vector<16x16xf32>
    %cst = arith.constant dense<0.000000e+00> : vector<16x4xf32>
    %9 = tpu.matmul %8, %1, %cst {dimension_numbers = #tpu.dot_dimension_numbers<[1], [0], [0], [1], [0, 0, 1, 1], [], []>} : vector<16x16xf32>, vector<16x4xf32>, vector<16x4xf32> -> vector<16x4xf32>
    %c0_2 = arith.constant 0 : index
    %c0_3 = arith.constant 0 : index
    %c0_4 = arith.constant 0 : index
    %10 = vector.load %arg2[%c0_2, %c0_3, %c0_4] : memref<2x4x8xf32, #tpu.memory_space<vmem>>, vector<1x4x8xf32>
    %11 = vector.shape_cast %10 : vector<1x4x8xf32> to vector<4x8xf32>
    %cst_5 = arith.constant dense<0.000000e+00> : vector<16x8xf32>
    %12 = tpu.matmul %9, %11, %cst_5 {dimension_numbers = #tpu.dot_dimension_numbers<[1], [0], [0], [1], [0, 0, 1, 1], [], []>} : vector<16x4xf32>, vector<4x8xf32>, vector<16x8xf32> -> vector<16x8xf32>
    %c1 = arith.constant 1 : index
    %c0_6 = arith.constant 0 : index
    %c0_7 = arith.constant 0 : index
    %13 = vector.load %arg2[%c1, %c0_6, %c0_7] : memref<2x4x8xf32, #tpu.memory_space<vmem>>, vector<1x4x8xf32>
    %14 = vector.shape_cast %13 : vector<1x4x8xf32> to vector<4x8xf32>
    %cst_8 = arith.constant dense<0.000000e+00> : vector<16x8xf32>
    %15 = tpu.matmul %1, %14, %cst_8 {dimension_numbers = #tpu.dot_dimension_numbers<[1], [0], [0], [1], [0, 0, 1, 1], [], []>} : vector<16x4xf32>, vector<4x8xf32>, vector<16x8xf32> -> vector<16x8xf32>
    %16 = arith.addf %12, %15 : vector<16x8xf32>
    %c0_9 = arith.constant 0 : index
    %c0_10 = arith.constant 0 : index
    %17 = vector.load %arg3[%c0_9, %c0_10] : memref<1x8xf32, #tpu.memory_space<vmem>>, vector<1x8xf32>
    %18 = vector.broadcast %17 : vector<1x8xf32> to vector<16x8xf32>
    %19 = arith.addf %16, %18 : vector<16x8xf32>
    %cst_11 = arith.constant 0.000000e+00 : f32
    %20 = vector.broadcast %cst_11 : f32 to vector<16x8xf32>
    %21 = arith.maximumf %19, %20 : vector<16x8xf32>
    %cst_12 = arith.constant dense<0.000000e+00> : vector<16x8xf32>
    %22 = tpu.matmul %8, %21, %cst_12 {dimension_numbers = #tpu.dot_dimension_numbers<[1], [0], [0], [1], [0, 0, 1, 1], [], []>} : vector<16x16xf32>, vector<16x8xf32>, vector<16x8xf32> -> vector<16x8xf32>
    %c0_13 = arith.constant 0 : index
    %c0_14 = arith.constant 0 : index
    %c0_15 = arith.constant 0 : index
    %23 = vector.load %arg4[%c0_13, %c0_14, %c0_15] : memref<2x8x8xf32, #tpu.memory_space<vmem>>, vector<1x8x8xf32>
    %24 = vector.shape_cast %23 : vector<1x8x8xf32> to vector<8x8xf32>
    %cst_16 = arith.constant dense<0.000000e+00> : vector<16x8xf32>
    %25 = tpu.matmul %22, %24, %cst_16 {dimension_numbers = #tpu.dot_dimension_numbers<[1], [0], [0], [1], [0, 0, 1, 1], [], []>} : vector<16x8xf32>, vector<8x8xf32>, vector<16x8xf32> -> vector<16x8xf32>
    %c1_17 = arith.constant 1 : index
    %c0_18 = arith.constant 0 : index
    %c0_19 = arith.constant 0 : index
    %26 = vector.load %arg4[%c1_17, %c0_18, %c0_19] : memref<2x8x8xf32, #tpu.memory_space<vmem>>, vector<1x8x8xf32>
    %27 = vector.shape_cast %26 : vector<1x8x8xf32> to vector<8x8xf32>
    %cst_20 = arith.constant dense<0.000000e+00> : vector<16x8xf32>
    %28 = tpu.matmul %21, %27, %cst_20 {dimension_numbers = #tpu.dot_dimension_numbers<[1], [0], [0], [1], [0, 0, 1, 1], [], []>} : vector<16x8xf32>, vector<8x8xf32>, vector<16x8xf32> -> vector<16x8xf32>
    %29 = arith.addf %25, %28 : vector<16x8xf32>
    %c0_21 = arith.constant 0 : index
    %c0_22 = arith.constant 0 : index
    %30 = vector.load %arg5[%c0_21, %c0_22] : memref<1x8xf32, #tpu.memory_space<vmem>>, vector<1x8xf32>
    %31 = vector.broadcast %30 : vector<1x8xf32> to vector<16x8xf32>
    %32 = arith.addf %29, %31 : vector<16x8xf32>
    %cst_23 = arith.constant 0.000000e+00 : f32
    %33 = vector.broadcast %cst_23 : f32 to vector<16x8xf32>
    %34 = arith.maximumf %32, %33 : vector<16x8xf32>
    %c0_24 = arith.constant 0 : index
    %c0_25 = arith.constant 0 : index
    %35 = vector.load %arg6[%c0_24, %c0_25] : memref<4x8xf32, #tpu.memory_space<vmem>>, vector<4x8xf32>
    %cst_26 = arith.constant dense<0.000000e+00> : vector<16x8xf32>
    %36 = tpu.matmul %1, %35, %cst_26 {dimension_numbers = #tpu.dot_dimension_numbers<[1], [0], [0], [1], [0, 0, 1, 1], [], []>} : vector<16x4xf32>, vector<4x8xf32>, vector<16x8xf32> -> vector<16x8xf32>
    %c0_27 = arith.constant 0 : index
    %c0_28 = arith.constant 0 : index
    %37 = vector.load %arg7[%c0_27, %c0_28] : memref<1x8xf32, #tpu.memory_space<vmem>>, vector<1x8xf32>
    %38 = vector.broadcast %37 : vector<1x8xf32> to vector<16x8xf32>
    %39 = arith.addf %36, %38 : vector<16x8xf32>
    %40 = arith.addf %34, %39 : vector<16x8xf32>
    %cst_29 = arith.constant 0.000000e+00 : f32
    %41 = vector.broadcast %cst_29 : f32 to vector<16x8xf32>
    %42 = arith.maximumf %40, %41 : vector<16x8xf32>
    %c0_30 = arith.constant 0 : index
    %c0_31 = arith.constant 0 : index
    %c0_32 = arith.constant 0 : index
    %43 = vector.load %arg8[%c0_30, %c0_31, %c0_32] : memref<1x16x8xf32, #tpu.memory_space<vmem>>, vector<1x16x8xf32>
    %44 = vector.shape_cast %43 : vector<1x16x8xf32> to vector<16x8xf32>
    %45 = vector.shape_cast %42 : vector<16x8xf32> to vector<1x16x8xf32>
    tpu.vector_store %arg8[%c0_30, %c0_31, %c0_32], %45 {strides = array<i32>} : memref<1x16x8xf32, #tpu.memory_space<vmem>>, vector<1x16x8xf32>,
    return
  }
  func.func @transform_0(%arg0: i32) -> (i32, i32, i32) {
    %c0_i32 = arith.constant 0 : i32
    %c0_i32_0 = arith.constant 0 : i32
    %c0_i32_1 = arith.constant 0 : i32
    return %arg0, %c0_i32, %c0_i32_0 : i32, i32, i32
  }
  func.func @transform_1(%arg0: i32) -> (i32, i32, i32) {
    %c0_i32 = arith.constant 0 : i32
    %c0_i32_0 = arith.constant 0 : i32
    %c0_i32_1 = arith.constant 0 : i32
    %c0_i32_2 = arith.constant 0 : i32
    return %c0_i32, %c0_i32_0, %c0_i32_1 : i32, i32, i32
  }
  func.func @transform_2(%arg0: i32) -> (i32, i32) {
    %c0_i32 = arith.constant 0 : i32
    %c0_i32_0 = arith.constant 0 : i32
    %c0_i32_1 = arith.constant 0 : i32
    return %c0_i32, %c0_i32_0 : i32, i32
  }
  func.func @transform_3(%arg0: i32) -> (i32, i32, i32) {
    %c0_i32 = arith.constant 0 : i32
    %c0_i32_0 = arith.constant 0 : i32
    %c0_i32_1 = arith.constant 0 : i32
    %c0_i32_2 = arith.constant 0 : i32
    return %c0_i32, %c0_i32_0, %c0_i32_1 : i32, i32, i32
  }
  func.func @transform_4(%arg0: i32) -> (i32, i32) {
    %c0_i32 = arith.constant 0 : i32
    %c0_i32_0 = arith.constant 0 : i32
    %c0_i32_1 = arith.constant 0 : i32
    return %c0_i32, %c0_i32_0 : i32, i32
  }
  func.func @transform_5(%arg0: i32) -> (i32, i32) {
    %c0_i32 = arith.constant 0 : i32
    %c0_i32_0 = arith.constant 0 : i32
    %c0_i32_1 = arith.constant 0 : i32
    return %c0_i32, %c0_i32_0 : i32, i32
  }
  func.func @transform_6(%arg0: i32) -> (i32, i32) {
    %c0_i32 = arith.constant 0 : i32
    %c0_i32_0 = arith.constant 0 : i32
    %c0_i32_1 = arith.constant 0 : i32
    return %c0_i32, %c0_i32_0 : i32, i32
  }
  func.func @transform_7(%arg0: i32) -> (i32, i32, i32) {
    %c0_i32 = arith.constant 0 : i32
    %c0_i32_0 = arith.constant 0 : i32
    %c0_i32_1 = arith.constant 0 : i32
    return %arg0, %c0_i32, %c0_i32_0 : i32, i32, i32
  }
}

</mosaic_0001>

<llo_original>
// kernel: tpu_custom_call.1
$region0: #{tpu_custom_call.1}
  #allocation0 [shape = 'u32[]', space=smem, size = 0x4, offset = 0x4, fixed_abs, tag = 'smem constant byte address 0x4 - core index']
  #allocation1 [shape = 'u32[144,128]{1,0:T(1,128)}', space=vmem, size = 0x12000, scoped, tag = 'internal scratch']
  %s0 = inlined_call_operand.vmem [shape: f32[2,16,4], index: 0, kind: input, shape index: {}]
  %s1 = inlined_call_operand.vmem [shape: f32[2,4,8], index: 1, kind: input, shape index: {}]
  %s2 = inlined_call_operand.vmem [shape: f32[1,8], index: 2, kind: input, shape index: {}]
  %s3 = inlined_call_operand.vmem [shape: f32[2,8,8], index: 3, kind: input, shape index: {}]
  %s4 = inlined_call_operand.vmem [shape: f32[1,8], index: 4, kind: input, shape index: {}]
  %s5 = inlined_call_operand.vmem [shape: f32[4,8], index: 5, kind: input, shape index: {}]
  %s6 = inlined_call_operand.vmem [shape: f32[1,8], index: 6, kind: input, shape index: {}]
  %s7 = inlined_call_operand.vmem [shape: f32[2,16,8], index: 7, kind: output, shape index: {}]
  %s8 = sld [smem:[#allocation0]]
  $region61: #{tpu_custom_call.1} parent=0
    _
  %s10 = ssub.s32 1, %s8
  %s11 = scalar_select 0, %s10, %s8
  loop: start=0, step=1, limit=4
  $region2: #{tpu_custom_call.1} parent=0 // loop_pre_header
    _
  $region3: #{tpu_custom_call.1} parent=0 // loop_header
    %s13 = sphi 0, %s17
    %p14 = scmp.ge.s32.totalorder %s13, 4
    %s23 = sphi 0, %s25
    %s26 = sphi 0, %s23
    %s27 = sphi 0, %s26
    %s43 = sphi 0, %s27
    %s47 = sphi 0, %s47
    %s49 = sphi 0, %s47
    %s50 = sphi 0, %s49
    %s64 = sphi 0, %s50
    %s68 = sphi 0, %s68
    %s70 = sphi 0, %s68
    %s71 = sphi 0, %s70
    %s85 = sphi 0, %s71
    %s89 = sphi 0, %s89
    %s91 = sphi 0, %s89
    %s92 = sphi 0, %s91
    %s106 = sphi 0, %s92
    %s110 = sphi 0, %s110
    %s112 = sphi 0, %s110
    %s113 = sphi 0, %s112
    %s127 = sphi 0, %s113
    %s131 = sphi 0, %s131
    %s133 = sphi 0, %s131
    %s134 = sphi 0, %s133
    %s148 = sphi 0, %s134
    %s152 = sphi 0, %s152
    %s154 = sphi 0, %s152
    %s155 = sphi 0, %s154
    %s169 = sphi 0, %s155
    %s175 = sphi 0, %s177
    %s178 = sphi 0, %s175
    %s179 = sphi 0, %s178
    %s195 = sphi 0, %s179
  $region4: #{tpu_custom_call.1} parent=0 // loop_header_branch
    %16 = sbr.rel (%p14) target = $region8
  $region5: #{tpu_custom_call.1} parent=0 // loop_body
    %s18 = ssub.s32 %s13, 1
    %s19 = ssub.s32 %s13, 2
    %s20 = sadd.s32 %s13, 1
    %s21 = ssub.s32 %s13, %s20
    %p22 = scmp.eq.s32.totalorder %s21, 0
    %s24 = sadd.s32 %s23, 1
    %s25 = scalar_select %p22, %s23, %s24
    %p28 = pneg %p22
    %p29 = scmp.eq.s32.totalorder %s13, 1
    %p30 = por %p28, %p29
    %p31 = scmp.ne.s32.totalorder %s23, %s26
    %p32 = scmp.eq.s32.totalorder %s13, 0
    %p33 = por %p31, %p32
    %p34 = scmp.ne.s32.totalorder %s23, %s26
    %p35 = scmp.eq.s32.totalorder %s18, 1
    %p36 = por %p34, %p35
    %p37 = scmp.ne.s32.totalorder %s26, %s27
    %p38 = scmp.eq.s32.totalorder %s18, 0
    %p39 = por %p37, %p38
    %p40 = scmp.ne.s32.totalorder %s26, %s27
    %p41 = scmp.eq.s32.totalorder %s19, 1
    %p42 = por %p40, %p41
    %p44 = scmp.ne.s32.totalorder %s27, %s43
    %p45 = scmp.eq.s32.totalorder %s19, 0
    %p46 = por %p44, %p45
    %s48 = sadd.s32 %s47, 1
    %p51 = scmp.eq.s32.totalorder %s13, 1
    %p52 = scmp.ne.s32.totalorder %s47, %s49
    %p53 = scmp.eq.s32.totalorder %s13, 0
    %p54 = por %p52, %p53
    %p55 = scmp.ne.s32.totalorder %s47, %s49
    %p56 = scmp.eq.s32.totalorder %s18, 1
    %p57 = por %p55, %p56
    %p58 = scmp.ne.s32.totalorder %s49, %s50
    %p59 = scmp.eq.s32.totalorder %s18, 0
    %p60 = por %p58, %p59
    %p61 = scmp.ne.s32.totalorder %s49, %s50
    %p62 = scmp.eq.s32.totalorder %s19, 1
    %p63 = por %p61, %p62
    %p65 = scmp.ne.s32.totalorder %s50, %s64
    %p66 = scmp.eq.s32.totalorder %s19, 0
    %p67 = por %p65, %p66
    %s69 = sadd.s32 %s68, 1
    %p72 = scmp.eq.s32.totalorder %s13, 1
    %p73 = scmp.ne.s32.totalorder %s68, %s70
    %p74 = scmp.eq.s32.totalorder %s13, 0
    %p75 = por %p73, %p74
    %p76 = scmp.ne.s32.totalorder %s68, %s70
    %p77 = scmp.eq.s32.totalorder %s18, 1
    %p78 = por %p76, %p77
    %p79 = scmp.ne.s32.totalorder %s70, %s71
    %p80 = scmp.eq.s32.totalorder %s18, 0
    %p81 = por %p79, %p80
    %p82 = scmp.ne.s32.totalorder %s70, %s71
    %p83 = scmp.eq.s32.totalorder %s19, 1
    %p84 = por %p82, %p83
    %p86 = scmp.ne.s32.totalorder %s71, %s85
    %p87 = scmp.eq.s32.totalorder %s19, 0
    %p88 = por %p86, %p87
    %s90 = sadd.s32 %s89, 1
    %p93 = scmp.eq.s32.totalorder %s13, 1
    %p94 = scmp.ne.s32.totalorder %s89, %s91
    %p95 = scmp.eq.s32.totalorder %s13, 0
    %p96 = por %p94, %p95
    %p97 = scmp.ne.s32.totalorder %s89, %s91
    %p98 = scmp.eq.s32.totalorder %s18, 1
    %p99 = por %p97, %p98
    %p100 = scmp.ne.s32.totalorder %s91, %s92
    %p101 = scmp.eq.s32.totalorder %s18, 0
    %p102 = por %p100, %p101
    %p103 = scmp.ne.s32.totalorder %s91, %s92
    %p104 = scmp.eq.s32.totalorder %s19, 1
    %p105 = por %p103, %p104
    %p107 = scmp.ne.s32.totalorder %s92, %s106
    %p108 = scmp.eq.s32.totalorder %s19, 0
    %p109 = por %p107, %p108
    %s111 = sadd.s32 %s110, 1
    %p114 = scmp.eq.s32.totalorder %s13, 1
    %p115 = scmp.ne.s32.totalorder %s110, %s112
    %p116 = scmp.eq.s32.totalorder %s13, 0
    %p117 = por %p115, %p116
    %p118 = scmp.ne.s32.totalorder %s110, %s112
    %p119 = scmp.eq.s32.totalorder %s18, 1
    %p120 = por %p118, %p119
    %p121 = scmp.ne.s32.totalorder %s112, %s113
    %p122 = scmp.eq.s32.totalorder %s18, 0
    %p123 = por %p121, %p122
    %p124 = scmp.ne.s32.totalorder %s112, %s113
    %p125 = scmp.eq.s32.totalorder %s19, 1
    %p126 = por %p124, %p125
    %p128 = scmp.ne.s32.totalorder %s113, %s127
    %p129 = scmp.eq.s32.totalorder %s19, 0
    %p130 = por %p128, %p129
    %s132 = sadd.s32 %s131, 1
    %p135 = scmp.eq.s32.totalorder %s13, 1
    %p136 = scmp.ne.s32.totalorder %s131, %s133
    %p137 = scmp.eq.s32.totalorder %s13, 0
    %p138 = por %p136, %p137
    %p139 = scmp.ne.s32.totalorder %s131, %s133
    %p140 = scmp.eq.s32.totalorder %s18, 1
    %p141 = por %p139, %p140
    %p142 = scmp.ne.s32.totalorder %s133, %s134
    %p143 = scmp.eq.s32.totalorder %s18, 0
    %p144 = por %p142, %p143
    %p145 = scmp.ne.s32.totalorder %s133, %s134
    %p146 = scmp.eq.s32.totalorder %s19, 1
    %p147 = por %p145, %p146
    %p149 = scmp.ne.s32.totalorder %s134, %s148
    %p150 = scmp.eq.s32.totalorder %s19, 0
    %p151 = por %p149, %p150
    %s153 = sadd.s32 %s152, 1
    %p156 = scmp.eq.s32.totalorder %s13, 1
    %p157 = scmp.ne.s32.totalorder %s152, %s154
    %p158 = scmp.eq.s32.totalorder %s13, 0
    %p159 = por %p157, %p158
    %p160 = scmp.ne.s32.totalorder %s152, %s154
    %p161 = scmp.eq.s32.totalorder %s18, 1
    %p162 = por %p160, %p161
    %p163 = scmp.ne.s32.totalorder %s154, %s155
    %p164 = scmp.eq.s32.totalorder %s18, 0
    %p165 = por %p163, %p164
    %p166 = scmp.ne.s32.totalorder %s154, %s155
    %p167 = scmp.eq.s32.totalorder %s19, 1
    %p168 = por %p166, %p167
    %p170 = scmp.ne.s32.totalorder %s155, %s169
    %p171 = scmp.eq.s32.totalorder %s19, 0
    %p172 = por %p170, %p171
    %s173 = ssub.s32 %s13, %s20
    %p174 = scmp.eq.s32.totalorder %s173, 0
    %s176 = sadd.s32 %s175, 1
    %s177 = scalar_select %p174, %s175, %s176
    %p180 = pneg %p174
    %p181 = scmp.eq.s32.totalorder %s13, 1
    %p182 = por %p180, %p181
    %p183 = scmp.ne.s32.totalorder %s175, %s178
    %p184 = scmp.eq.s32.totalorder %s13, 0
    %p185 = por %p183, %p184
    %p186 = scmp.ne.s32.totalorder %s175, %s178
    %p187 = scmp.eq.s32.totalorder %s18, 1
    %p188 = por %p186, %p187
    %p189 = scmp.ne.s32.totalorder %s178, %s179
    %p190 = scmp.eq.s32.totalorder %s18, 0
    %p191 = por %p189, %p190
    %p192 = scmp.ne.s32.totalorder %s178, %s179
    %p193 = scmp.eq.s32.totalorder %s19, 1
    %p194 = por %p192, %p193
    %p196 = scmp.ne.s32.totalorder %s179, %s195
    %p197 = scmp.eq.s32.totalorder %s19, 0
    %p198 = por %p196, %p197
    %p199 = scmp.le.s32.totalorder 1, %s13
    %p200 = scmp.lt.s32.totalorder %s13, 3
    %p201 = pnand %p199, %p200
    %p202 = pneg %p201
    // Predicated region
    $region9: #{tpu_custom_call.1} parent=5 // pred_check
      _
    $region10: #{tpu_custom_call.1} parent=5 // pred_check_branch
      %204 = sbr.rel (%p201) target = $region12
    $region11: #{tpu_custom_call.1} parent=5 // pred_region
      %s205 = ssub.s32 %s13, 1
      // Predicated region
      $region13: #{tpu_custom_call.1} parent=11 // pred_check
        %p206 = pneg %p60
      $region14: #{tpu_custom_call.1} parent=11 // pred_check_branch
        %208 = sbr.rel (%p206) target = $region16
      $region15: #{tpu_custom_call.1} parent=11 // pred_region
        _
      $region16: #{tpu_custom_call.1} parent=11 // pred_fallthru
        _
      // Predicated region
      $region17: #{tpu_custom_call.1} parent=11 // pred_check
        %p209 = pneg %p81
      $region18: #{tpu_custom_call.1} parent=11 // pred_check_branch
        %211 = sbr.rel (%p209) target = $region20
      $region19: #{tpu_custom_call.1} parent=11 // pred_region
        _
      $region20: #{tpu_custom_call.1} parent=11 // pred_fallthru
        _
      // Predicated region
      $region21: #{tpu_custom_call.1} parent=11 // pred_check
        %p212 = pneg %p102
      $region22: #{tpu_custom_call.1} parent=11 // pred_check_branch
        %214 = sbr.rel (%p212) target = $region24
      $region23: #{tpu_custom_call.1} parent=11 // pred_region
        _
      $region24: #{tpu_custom_call.1} parent=11 // pred_fallthru
        _
      // Predicated region
      $region25: #{tpu_custom_call.1} parent=11 // pred_check
        %p215 = pneg %p123
      $region26: #{tpu_custom_call.1} parent=11 // pred_check_branch
        %217 = sbr.rel (%p215) target = $region28
      $region27: #{tpu_custom_call.1} parent=11 // pred_region
        _
      $region28: #{tpu_custom_call.1} parent=11 // pred_fallthru
        _
      // Predicated region
      $region29: #{tpu_custom_call.1} parent=11 // pred_check
        %p218 = pneg %p144
      $region30: #{tpu_custom_call.1} parent=11 // pred_check_branch
        %220 = sbr.rel (%p218) target = $region32
      $region31: #{tpu_custom_call.1} parent=11 // pred_region
        _
      $region32: #{tpu_custom_call.1} parent=11 // pred_fallthru
        _
      // Predicated region
      $region33: #{tpu_custom_call.1} parent=11 // pred_check
        %p221 = pneg %p165
      $region34: #{tpu_custom_call.1} parent=11 // pred_check_branch
        %223 = sbr.rel (%p221) target = $region36
      $region35: #{tpu_custom_call.1} parent=11 // pred_region
        _
      $region36: #{tpu_custom_call.1} parent=11 // pred_fallthru
        _
    $region12: #{tpu_custom_call.1} parent=5 // pred_fallthru
      _
    %p224 = scmp.lt.s32.totalorder %s13, 2
    // Predicated region
    $region37: #{tpu_custom_call.1} parent=5 // pred_check
      %p225 = pneg %p224
    $region38: #{tpu_custom_call.1} parent=5 // pred_check_branch
      %227 = sbr.rel (%p225) target = $region40
    $region39: #{tpu_custom_call.1} parent=5 // pred_region
      // Predicated region
      $region41: #{tpu_custom_call.1} parent=39 // pred_check
        %p228 = pneg %p33
      $region42: #{tpu_custom_call.1} parent=39 // pred_check_branch
        %230 = sbr.rel (%p228) target = $region44
      $region43: #{tpu_custom_call.1} parent=39 // pred_region
        %p231 = scmp.lt.s32.totalorder %s13, 1
        %s232 = scalar_select %p231, %s13, 1
        %s233 = smul.addr %s232, 2
        %s234 = smul.addr %s233, 8
        %s235 = scalar_lea.vmem %s0, %s234
      $region44: #{tpu_custom_call.1} parent=39 // pred_fallthru
        _
    $region40: #{tpu_custom_call.1} parent=5 // pred_fallthru
      _
    %p236 = scmp.le.s32.totalorder 1, %s13
    %p237 = scmp.lt.s32.totalorder %s13, 3
    %p238 = pnand %p236, %p237
    %p239 = pneg %p238
    // Predicated region
    $region45: #{tpu_custom_call.1} parent=5 // pred_check
      _
    $region46: #{tpu_custom_call.1} parent=5 // pred_check_branch
      %241 = sbr.rel (%p238) target = $region48
    $region47: #{tpu_custom_call.1} parent=5 // pred_region
      %s242 = ssub.s32 %s13, 1
      %p243 = scmp.lt.s32.totalorder %s18, 1
      %s244 = scalar_select %p243, %s18, 1
      %s245 = smul.addr %s244, 2
      %s246 = smul.addr %s245, 8
      %s247 = scalar_lea.vmem %s0, %s246
      %p248 = pneg %p39
      %p249 = pneg %p36
      %p250 = pneg %p60
      %p251 = pneg %p57
      %p252 = pneg %p81
      %p253 = pneg %p78
      %p254 = pneg %p102
      %p255 = pneg %p99
      %p256 = pneg %p123
      %p257 = pneg %p120
      %p258 = pneg %p144
      %p259 = pneg %p141
      %p260 = pneg %p165
      %p261 = pneg %p162
      %p262 = pneg %p191
      %p263 = pneg %p188
      %p264 = scmp.lt.s32.totalorder %s18, 1
      %s265 = scalar_select %p264, %s18, 1
      %s266 = smul.addr %s265, 2
      %s267 = smul.addr %s266, 8
      %s268 = scalar_lea.vmem %s7, %s267
      %p269 = scmp.lt.s32.totalorder %s18, 1
      %s270 = scalar_select %p269, %s18, 1
      %s271 = smul.addr %s270, 2
      %s272 = smul.addr %s271, 8
      %s273 = scalar_lea.vmem %s0, %s272
      %p274 = scmp.lt.s32.totalorder %s18, 1
      %s275 = scalar_select %p274, %s18, 1
      %s276 = smul.addr %s275, 2
      %s277 = smul.addr %s276, 8
      %s278 = scalar_lea.vmem %s7, %s277
      %v279 = vld [vmem:[%s273] sm:$0xff]
      %v280 = vld [vmem:[%s273 + $0x8] sm:$0xff]
      %v281 = vlaneseq
      %v282 = vshrl.u32 %v281, 7
      %v283 = vadd.s32 %v282, 8
      %v284 = vlaneseq
      %v285 = vand.u32 %v284, 127
      %v286 = vsub.s32 %v282, %v285
      %v287 = vsub.s32 %v283, %v285
      %vm288 = vcmp.eq.s32.totalorder %v286, 1
      %vm289 = vcmp.eq.s32.totalorder %v287, 1
      %v290 = vsel %vm288, 1, 0
      %v291 = vsel %vm289, 1, 0
      %v292 = vcvt.s32.f32 %v290
      %v293 = vcvt.s32.f32 %v291
      %vm294 = vcmask 130048
      %v296 = vsel %vm294, %v292, 0
      %v299 = vsel %vm294, %v293, 0
      %301 = vmatprep.subr.mxu0 0.0
      %302 = vmatpush1.msra.mxu0 0.0
      %303 = vmatprep.subr.mxu0 0.0
      %304 = vmatpush1.msra.mxu0 0.0
      %305 = vmatprep.subr.mxu0 0.0
      %306 = vmatpush1.msra.mxu0 0.0
      %307 = vmatprep.subr.mxu0 0.0
      %308 = vmatpush1.msra.mxu0 0.0
      %309 = vmatprep.subr.mxu0 0.0
      %310 = vmatpush1.msra.mxu0 0.0
      %311 = vmatprep.subr.mxu0 0.0
      %312 = vmatpush1.msra.mxu0 0.0
      %313 = vmatprep.subr.mxu0 0.0
      %314 = vmatpush1.msra.mxu0 0.0
      %315 = vmatprep.subr.mxu0 0.0
      %316 = vmatpush1.msra.mxu0 0.0
      %317 = vmatprep.subr.mxu0 0.0
      %318 = vmatpush1.msra.mxu0 0.0
      %319 = vmatprep.subr.mxu0 0.0
      %320 = vmatpush1.msra.mxu0 0.0
      %321 = vmatprep.subr.mxu0 0.0
      %322 = vmatpush1.msra.mxu0 0.0
      %323 = vmatprep.subr.mxu0 0.0
      %324 = vmatpush1.msra.mxu0 0.0
      %325 = vmatprep.subr.mxu0 0.0
      %326 = vmatpush1.msra.mxu0 0.0
      %327 = vmatprep.subr.mxu0 0.0
      %328 = vmatpush1.msra.mxu0 0.0
      %329 = vmatprep.subr.mxu0 0.0
      %330 = vmatpush1.msra.mxu0 %v280
      %331 = vmatprep.subr.mxu0 0.0
      %332 = vmatpush1.msra.mxu0 %v279
      %333 = vmatprep.subr.mxu0 0.0
      %334 = vmatpush2.msra.mxu0 0.0
      %335 = vmatprep.subr.mxu0 0.0
      %336 = vmatpush2.msra.mxu0 0.0
      %337 = vmatprep.subr.mxu0 0.0
      %338 = vmatpush2.msra.mxu0 0.0
      %339 = vmatprep.subr.mxu0 0.0
      %340 = vmatpush2.msra.mxu0 0.0
      %341 = vmatprep.subr.mxu0 0.0
      %342 = vmatpush2.msra.mxu0 0.0
      %343 = vmatprep.subr.mxu0 0.0
      %344 = vmatpush2.msra.mxu0 0.0
      %345 = vmatprep.subr.mxu0 0.0
      %346 = vmatpush2.msra.mxu0 0.0
      %347 = vmatprep.subr.mxu0 0.0
      %348 = vmatpush2.msra.mxu0 0.0
      %349 = vmatprep.subr.mxu0 0.0
      %350 = vmatpush2.msra.mxu0 0.0
      %351 = vmatprep.subr.mxu0 0.0
      %352 = vmatpush2.msra.mxu0 0.0
      %353 = vmatprep.subr.mxu0 0.0
      %354 = vmatpush2.msra.mxu0 0.0
      %355 = vmatprep.subr.mxu0 0.0
      %356 = vmatpush2.msra.mxu0 0.0
      %357 = vmatprep.subr.mxu0 0.0
      %358 = vmatpush2.msra.mxu0 0.0
      %359 = vmatprep.subr.mxu0 0.0
      %360 = vmatpush2.msra.mxu0 0.0
      %361 = vmatprep.subr.mxu0 0.0
      %362 = vmatpush2.msra.mxu0 0.0
      %363 = vmatprep.subr.mxu0 0.0
      %364 = vmatpush2.msra.mxu0 0.0
      %365 = vmatprep.mubr.f32.mxu0 0.0
      %366 = vmatmul.mubr.f32.gmra.mxu0 %v296
      %v367 = vpop.f32.mrf.mxu0
      %v368 = vadd.f32 0.0, %v367
      %v369 = vpop.f32.mrf.mxu0
      %370 = vmatprep.mubr.f32.mxu0 0.0
      %371 = vmatmul.mubr.f32.gmra.mxu0 %v299
      %v372 = vpop.f32.mrf.mxu0
      %v373 = vadd.f32 0.0, %v372
      %v374 = vpop.f32.mrf.mxu0
      %375 = vdwg.mxu0
      %v376 = vld [vmem:[%s1] sm:$0xf]
      %s377 = scalar_lea.vmem %s1, 4
      %v378 = vld [vmem:[%s377] sm:$0xf]
      %vm379 = vcmask 31744
      %v381 = vsel %vm379, %v279, 0
      %v384 = vsel %vm379, %v280, 0
      %vm386 = vcmask 1043456
      %v388 = vsel %vm386, %v378, 0
      %390 = vmatprep.subr.mxu0 0.0
      %391 = vmatpush1.msra.mxu0 0.0
      %392 = vmatprep.subr.mxu0 0.0
      %393 = vmatpush1.msra.mxu0 0.0
      %394 = vmatprep.subr.mxu0 0.0
      %395 = vmatpush1.msra.mxu0 0.0
      %396 = vmatprep.subr.mxu0 0.0
      %397 = vmatpush1.msra.mxu0 0.0
      %398 = vmatprep.subr.mxu0 0.0
      %399 = vmatpush1.msra.mxu0 0.0
      %400 = vmatprep.subr.mxu0 0.0
      %401 = vmatpush1.msra.mxu0 0.0
      %402 = vmatprep.subr.mxu0 0.0
      %403 = vmatpush1.msra.mxu0 0.0
      %404 = vmatprep.subr.mxu0 0.0
      %405 = vmatpush1.msra.mxu0 0.0
      %406 = vmatprep.subr.mxu0 0.0
      %407 = vmatpush1.msra.mxu0 0.0
      %408 = vmatprep.subr.mxu0 0.0
      %409 = vmatpush1.msra.mxu0 0.0
      %410 = vmatprep.subr.mxu0 0.0
      %411 = vmatpush1.msra.mxu0 0.0
      %412 = vmatprep.subr.mxu0 0.0
      %413 = vmatpush1.msra.mxu0 0.0
      %414 = vmatprep.subr.mxu0 0.0
      %415 = vmatpush1.msra.mxu0 0.0
      %416 = vmatprep.subr.mxu0 0.0
      %417 = vmatpush1.msra.mxu0 0.0
      %418 = vmatprep.subr.mxu0 0.0
      %419 = vmatpush1.msra.mxu0 0.0
      %420 = vmatprep.subr.mxu0 0.0
      %421 = vmatpush1.msra.mxu0 %v388
      %422 = vmatprep.subr.mxu0 0.0
      %423 = vmatpush2.msra.mxu0 0.0
      %424 = vmatprep.subr.mxu0 0.0
      %425 = vmatpush2.msra.mxu0 0.0
      %426 = vmatprep.subr.mxu0 0.0
      %427 = vmatpush2.msra.mxu0 0.0
      %428 = vmatprep.subr.mxu0 0.0
      %429 = vmatpush2.msra.mxu0 0.0
      %430 = vmatprep.subr.mxu0 0.0
      %431 = vmatpush2.msra.mxu0 0.0
      %432 = vmatprep.subr.mxu0 0.0
      %433 = vmatpush2.msra.mxu0 0.0
      %434 = vmatprep.subr.mxu0 0.0
      %435 = vmatpush2.msra.mxu0 0.0
      %436 = vmatprep.subr.mxu0 0.0
      %437 = vmatpush2.msra.mxu0 0.0
      %438 = vmatprep.subr.mxu0 0.0
      %439 = vmatpush2.msra.mxu0 0.0
      %440 = vmatprep.subr.mxu0 0.0
      %441 = vmatpush2.msra.mxu0 0.0
      %442 = vmatprep.subr.mxu0 0.0
      %443 = vmatpush2.msra.mxu0 0.0
      %444 = vmatprep.subr.mxu0 0.0
      %445 = vmatpush2.msra.mxu0 0.0
      %446 = vmatprep.subr.mxu0 0.0
      %447 = vmatpush2.msra.mxu0 0.0
      %448 = vmatprep.subr.mxu0 0.0
      %449 = vmatpush2.msra.mxu0 0.0
      %450 = vmatprep.subr.mxu0 0.0
      %451 = vmatpush2.msra.mxu0 0.0
      %452 = vmatprep.subr.mxu0 0.0
      %453 = vmatpush2.msra.mxu0 0.0
      %454 = vmatprep.mubr.f32.mxu0 0.0
      %455 = vmatmul.mubr.f32.gmra.mxu0 %v381
      %v456 = vpop.f32.mrf.mxu0
      %v457 = vadd.f32 0.0, %v456
      %v458 = vpop.f32.mrf.mxu0
      %459 = vmatprep.mubr.f32.mxu0 0.0
      %460 = vmatmul.mubr.f32.gmra.mxu0 %v384
      %v461 = vpop.f32.mrf.mxu0
      %v462 = vadd.f32 0.0, %v461
      %v463 = vpop.f32.mrf.mxu0
      %464 = vdwg.mxu0
      %v466 = vsel %vm379, %v368, 0
      %v469 = vsel %vm379, %v373, 0
      %v472 = vsel %vm386, %v376, 0
      %474 = vmatprep.subr.mxu0 0.0
      %475 = vmatpush1.msra.mxu0 0.0
      %476 = vmatprep.subr.mxu0 0.0
      %477 = vmatpush1.msra.mxu0 0.0
      %478 = vmatprep.subr.mxu0 0.0
      %479 = vmatpush1.msra.mxu0 0.0
      %480 = vmatprep.subr.mxu0 0.0
      %481 = vmatpush1.msra.mxu0 0.0
      %482 = vmatprep.subr.mxu0 0.0
      %483 = vmatpush1.msra.mxu0 0.0
      %484 = vmatprep.subr.mxu0 0.0
      %485 = vmatpush1.msra.mxu0 0.0
      %486 = vmatprep.subr.mxu0 0.0
      %487 = vmatpush1.msra.mxu0 0.0
      %488 = vmatprep.subr.mxu0 0.0
      %489 = vmatpush1.msra.mxu0 0.0
      %490 = vmatprep.subr.mxu0 0.0
      %491 = vmatpush1.msra.mxu0 0.0
      %492 = vmatprep.subr.mxu0 0.0
      %493 = vmatpush1.msra.mxu0 0.0
      %494 = vmatprep.subr.mxu0 0.0
      %495 = vmatpush1.msra.mxu0 0.0
      %496 = vmatprep.subr.mxu0 0.0
      %497 = vmatpush1.msra.mxu0 0.0
      %498 = vmatprep.subr.mxu0 0.0
      %499 = vmatpush1.msra.mxu0 0.0
      %500 = vmatprep.subr.mxu0 0.0
      %501 = vmatpush1.msra.mxu0 0.0
      %502 = vmatprep.subr.mxu0 0.0
      %503 = vmatpush1.msra.mxu0 0.0
      %504 = vmatprep.subr.mxu0 0.0
      %505 = vmatpush1.msra.mxu0 %v472
      %506 = vmatprep.subr.mxu0 0.0
      %507 = vmatpush2.msra.mxu0 0.0
      %508 = vmatprep.subr.mxu0 0.0
      %509 = vmatpush2.msra.mxu0 0.0
      %510 = vmatprep.subr.mxu0 0.0
      %511 = vmatpush2.msra.mxu0 0.0
      %512 = vmatprep.subr.mxu0 0.0
      %513 = vmatpush2.msra.mxu0 0.0
      %514 = vmatprep.subr.mxu0 0.0
      %515 = vmatpush2.msra.mxu0 0.0
      %516 = vmatprep.subr.mxu0 0.0
      %517 = vmatpush2.msra.mxu0 0.0
      %518 = vmatprep.subr.mxu0 0.0
      %519 = vmatpush2.msra.mxu0 0.0
      %520 = vmatprep.subr.mxu0 0.0
      %521 = vmatpush2.msra.mxu0 0.0
      %522 = vmatprep.subr.mxu0 0.0
      %523 = vmatpush2.msra.mxu0 0.0
      %524 = vmatprep.subr.mxu0 0.0
      %525 = vmatpush2.msra.mxu0 0.0
      %526 = vmatprep.subr.mxu0 0.0
      %527 = vmatpush2.msra.mxu0 0.0
      %528 = vmatprep.subr.mxu0 0.0
      %529 = vmatpush2.msra.mxu0 0.0
      %530 = vmatprep.subr.mxu0 0.0
      %531 = vmatpush2.msra.mxu0 0.0
      %532 = vmatprep.subr.mxu0 0.0
      %533 = vmatpush2.msra.mxu0 0.0
      %534 = vmatprep.subr.mxu0 0.0
      %535 = vmatpush2.msra.mxu0 0.0
      %536 = vmatprep.subr.mxu0 0.0
      %537 = vmatpush2.msra.mxu0 0.0
      %538 = vmatprep.mubr.f32.mxu0 0.0
      %539 = vmatmul.mubr.f32.gmra.mxu0 %v466
      %v540 = vpop.f32.mrf.mxu0
      %v541 = vadd.f32 %v457, %v540
      %v542 = vpop.f32.mrf.mxu0
      %543 = vmatprep.mubr.f32.mxu0 0.0
      %544 = vmatmul.mubr.f32.gmra.mxu0 %v469
      %v545 = vpop.f32.mrf.mxu0
      %v546 = vadd.f32 %v462, %v545
      %v547 = vpop.f32.mrf.mxu0
      %548 = vdwg.mxu0
      %v549 = vld [vmem:[%s2] sm:$0x1]
      %v551 = vlaneseq
      %v552 = vshrl.u32 %v551, 7
      %v553 = vsub.s32 0, %v552
      %v554 = vrot.slane %v549, %v553
      %v556 = vadd.f32 %v541, %v554
      %v557 = vadd.f32 %v546, %v554
      %v558 = vmax.f32 %v556, 0.0
      %v559 = vmax.f32 %v557, 0.0
      %560 = vmatprep.subr.mxu0 0.0
      %561 = vmatpush1.msra.mxu0 0.0
      %562 = vmatprep.subr.mxu0 0.0
      %563 = vmatpush1.msra.mxu0 0.0
      %564 = vmatprep.subr.mxu0 0.0
      %565 = vmatpush1.msra.mxu0 0.0
      %566 = vmatprep.subr.mxu0 0.0
      %567 = vmatpush1.msra.mxu0 0.0
      %568 = vmatprep.subr.mxu0 0.0
      %569 = vmatpush1.msra.mxu0 0.0
      %570 = vmatprep.subr.mxu0 0.0
      %571 = vmatpush1.msra.mxu0 0.0
      %572 = vmatprep.subr.mxu0 0.0
      %573 = vmatpush1.msra.mxu0 0.0
      %574 = vmatprep.subr.mxu0 0.0
      %575 = vmatpush1.msra.mxu0 0.0
      %576 = vmatprep.subr.mxu0 0.0
      %577 = vmatpush1.msra.mxu0 0.0
      %578 = vmatprep.subr.mxu0 0.0
      %579 = vmatpush1.msra.mxu0 0.0
      %580 = vmatprep.subr.mxu0 0.0
      %581 = vmatpush1.msra.mxu0 0.0
      %582 = vmatprep.subr.mxu0 0.0
      %583 = vmatpush1.msra.mxu0 0.0
      %584 = vmatprep.subr.mxu0 0.0
      %585 = vmatpush1.msra.mxu0 0.0
      %586 = vmatprep.subr.mxu0 0.0
      %587 = vmatpush1.msra.mxu0 0.0
      %588 = vmatprep.subr.mxu0 0.0
      %589 = vmatpush1.msra.mxu0 %v559
      %590 = vmatprep.subr.mxu0 0.0
      %591 = vmatpush1.msra.mxu0 %v558
      %592 = vmatprep.subr.mxu0 0.0
      %593 = vmatpush2.msra.mxu0 0.0
      %594 = vmatprep.subr.mxu0 0.0
      %595 = vmatpush2.msra.mxu0 0.0
      %596 = vmatprep.subr.mxu0 0.0
      %597 = vmatpush2.msra.mxu0 0.0
      %598 = vmatprep.subr.mxu0 0.0
      %599 = vmatpush2.msra.mxu0 0.0
      %600 = vmatprep.subr.mxu0 0.0
      %601 = vmatpush2.msra.mxu0 0.0
      %602 = vmatprep.subr.mxu0 0.0
      %603 = vmatpush2.msra.mxu0 0.0
      %604 = vmatprep.subr.mxu0 0.0
      %605 = vmatpush2.msra.mxu0 0.0
      %606 = vmatprep.subr.mxu0 0.0
      %607 = vmatpush2.msra.mxu0 0.0
      %608 = vmatprep.subr.mxu0 0.0
      %609 = vmatpush2.msra.mxu0 0.0
      %610 = vmatprep.subr.mxu0 0.0
      %611 = vmatpush2.msra.mxu0 0.0
      %612 = vmatprep.subr.mxu0 0.0
      %613 = vmatpush2.msra.mxu0 0.0
      %614 = vmatprep.subr.mxu0 0.0
      %615 = vmatpush2.msra.mxu0 0.0
      %616 = vmatprep.subr.mxu0 0.0
      %617 = vmatpush2.msra.mxu0 0.0
      %618 = vmatprep.subr.mxu0 0.0
      %619 = vmatpush2.msra.mxu0 0.0
      %620 = vmatprep.subr.mxu0 0.0
      %621 = vmatpush2.msra.mxu0 0.0
      %622 = vmatprep.subr.mxu0 0.0
      %623 = vmatpush2.msra.mxu0 0.0
      %624 = vmatprep.mubr.f32.mxu0 0.0
      %625 = vmatmul.mubr.f32.gmra.mxu0 %v296
      %v626 = vpop.f32.mrf.mxu0
      %v627 = vadd.f32 0.0, %v626
      %v628 = vpop.f32.mrf.mxu0
      %629 = vmatprep.mubr.f32.mxu0 0.0
      %630 = vmatmul.mubr.f32.gmra.mxu0 %v299
      %v631 = vpop.f32.mrf.mxu0
      %v632 = vadd.f32 0.0, %v631
      %v633 = vpop.f32.mrf.mxu0
      %634 = vdwg.mxu0
      %v635 = vld [vmem:[%s3] sm:$0xff]
      %s636 = scalar_lea.vmem %s3, 8
      %v637 = vld [vmem:[%s636] sm:$0xff]
      %vm638 = vcmask 64512
      %v640 = vsel %vm638, %v558, 0
      %v643 = vsel %vm638, %v559, 0
      %645 = vmatprep.subr.mxu0 0.0
      %646 = vmatpush1.msra.mxu0 0.0
      %647 = vmatprep.subr.mxu0 0.0
      %648 = vmatpush1.msra.mxu0 0.0
      %649 = vmatprep.subr.mxu0 0.0
      %650 = vmatpush1.msra.mxu0 0.0
      %651 = vmatprep.subr.mxu0 0.0
      %652 = vmatpush1.msra.mxu0 0.0
      %653 = vmatprep.subr.mxu0 0.0
      %654 = vmatpush1.msra.mxu0 0.0
      %655 = vmatprep.subr.mxu0 0.0
      %656 = vmatpush1.msra.mxu0 0.0
      %657 = vmatprep.subr.mxu0 0.0
      %658 = vmatpush1.msra.mxu0 0.0
      %659 = vmatprep.subr.mxu0 0.0
      %660 = vmatpush1.msra.mxu0 0.0
      %661 = vmatprep.subr.mxu0 0.0
      %662 = vmatpush1.msra.mxu0 0.0
      %663 = vmatprep.subr.mxu0 0.0
      %664 = vmatpush1.msra.mxu0 0.0
      %665 = vmatprep.subr.mxu0 0.0
      %666 = vmatpush1.msra.mxu0 0.0
      %667 = vmatprep.subr.mxu0 0.0
      %668 = vmatpush1.msra.mxu0 0.0
      %669 = vmatprep.subr.mxu0 0.0
      %670 = vmatpush1.msra.mxu0 0.0
      %671 = vmatprep.subr.mxu0 0.0
      %672 = vmatpush1.msra.mxu0 0.0
      %673 = vmatprep.subr.mxu0 0.0
      %674 = vmatpush1.msra.mxu0 0.0
      %675 = vmatprep.subr.mxu0 0.0
      %676 = vmatpush1.msra.mxu0 %v637
      %677 = vmatprep.subr.mxu0 0.0
      %678 = vmatpush2.msra.mxu0 0.0
      %679 = vmatprep.subr.mxu0 0.0
      %680 = vmatpush2.msra.mxu0 0.0
      %681 = vmatprep.subr.mxu0 0.0
      %682 = vmatpush2.msra.mxu0 0.0
      %683 = vmatprep.subr.mxu0 0.0
      %684 = vmatpush2.msra.mxu0 0.0
      %685 = vmatprep.subr.mxu0 0.0
      %686 = vmatpush2.msra.mxu0 0.0
      %687 = vmatprep.subr.mxu0 0.0
      %688 = vmatpush2.msra.mxu0 0.0
      %689 = vmatprep.subr.mxu0 0.0
      %690 = vmatpush2.msra.mxu0 0.0
      %691 = vmatprep.subr.mxu0 0.0
      %692 = vmatpush2.msra.mxu0 0.0
      %693 = vmatprep.subr.mxu0 0.0
      %694 = vmatpush2.msra.mxu0 0.0
      %695 = vmatprep.subr.mxu0 0.0
      %696 = vmatpush2.msra.mxu0 0.0
      %697 = vmatprep.subr.mxu0 0.0
      %698 = vmatpush2.msra.mxu0 0.0
      %699 = vmatprep.subr.mxu0 0.0
      %700 = vmatpush2.msra.mxu0 0.0
      %701 = vmatprep.subr.mxu0 0.0
      %702 = vmatpush2.msra.mxu0 0.0
      %703 = vmatprep.subr.mxu0 0.0
      %704 = vmatpush2.msra.mxu0 0.0
      %705 = vmatprep.subr.mxu0 0.0
      %706 = vmatpush2.msra.mxu0 0.0
      %707 = vmatprep.subr.mxu0 0.0
      %708 = vmatpush2.msra.mxu0 0.0
      %709 = vmatprep.mubr.f32.mxu0 0.0
      %710 = vmatmul.mubr.f32.gmra.mxu0 %v640
      %v711 = vpop.f32.mrf.mxu0
      %v712 = vadd.f32 0.0, %v711
      %v713 = vpop.f32.mrf.mxu0
      %714 = vmatprep.mubr.f32.mxu0 0.0
      %715 = vmatmul.mubr.f32.gmra.mxu0 %v643
      %v716 = vpop.f32.mrf.mxu0
      %v717 = vadd.f32 0.0, %v716
      %v718 = vpop.f32.mrf.mxu0
      %719 = vdwg.mxu0
      %v721 = vsel %vm638, %v627, 0
      %v724 = vsel %vm638, %v632, 0
      %726 = vmatprep.subr.mxu0 0.0
      %727 = vmatpush1.msra.mxu0 0.0
      %728 = vmatprep.subr.mxu0 0.0
      %729 = vmatpush1.msra.mxu0 0.0
      %730 = vmatprep.subr.mxu0 0.0
      %731 = vmatpush1.msra.mxu0 0.0
      %732 = vmatprep.subr.mxu0 0.0
      %733 = vmatpush1.msra.mxu0 0.0
      %734 = vmatprep.subr.mxu0 0.0
      %735 = vmatpush1.msra.mxu0 0.0
      %736 = vmatprep.subr.mxu0 0.0
      %737 = vmatpush1.msra.mxu0 0.0
      %738 = vmatprep.subr.mxu0 0.0
      %739 = vmatpush1.msra.mxu0 0.0
      %740 = vmatprep.subr.mxu0 0.0
      %741 = vmatpush1.msra.mxu0 0.0
      %742 = vmatprep.subr.mxu0 0.0
      %743 = vmatpush1.msra.mxu0 0.0
      %744 = vmatprep.subr.mxu0 0.0
      %745 = vmatpush1.msra.mxu0 0.0
      %746 = vmatprep.subr.mxu0 0.0
      %747 = vmatpush1.msra.mxu0 0.0
      %748 = vmatprep.subr.mxu0 0.0
      %749 = vmatpush1.msra.mxu0 0.0
      %750 = vmatprep.subr.mxu0 0.0
      %751 = vmatpush1.msra.mxu0 0.0
      %752 = vmatprep.subr.mxu0 0.0
      %753 = vmatpush1.msra.mxu0 0.0
      %754 = vmatprep.subr.mxu0 0.0
      %755 = vmatpush1.msra.mxu0 0.0
      %756 = vmatprep.subr.mxu0 0.0
      %757 = vmatpush1.msra.mxu0 %v635
      %758 = vmatprep.subr.mxu0 0.0
      %759 = vmatpush2.msra.mxu0 0.0
      %760 = vmatprep.subr.mxu0 0.0
      %761 = vmatpush2.msra.mxu0 0.0
      %762 = vmatprep.subr.mxu0 0.0
      %763 = vmatpush2.msra.mxu0 0.0
      %764 = vmatprep.subr.mxu0 0.0
      %765 = vmatpush2.msra.mxu0 0.0
      %766 = vmatprep.subr.mxu0 0.0
      %767 = vmatpush2.msra.mxu0 0.0
      %768 = vmatprep.subr.mxu0 0.0
      %769 = vmatpush2.msra.mxu0 0.0
      %770 = vmatprep.subr.mxu0 0.0
      %771 = vmatpush2.msra.mxu0 0.0
      %772 = vmatprep.subr.mxu0 0.0
      %773 = vmatpush2.msra.mxu0 0.0
      %774 = vmatprep.subr.mxu0 0.0
      %775 = vmatpush2.msra.mxu0 0.0
      %776 = vmatprep.subr.mxu0 0.0
      %777 = vmatpush2.msra.mxu0 0.0
      %778 = vmatprep.subr.mxu0 0.0
      %779 = vmatpush2.msra.mxu0 0.0
      %780 = vmatprep.subr.mxu0 0.0
      %781 = vmatpush2.msra.mxu0 0.0
      %782 = vmatprep.subr.mxu0 0.0
      %783 = vmatpush2.msra.mxu0 0.0
      %784 = vmatprep.subr.mxu0 0.0
      %785 = vmatpush2.msra.mxu0 0.0
      %786 = vmatprep.subr.mxu0 0.0
      %787 = vmatpush2.msra.mxu0 0.0
      %788 = vmatprep.subr.mxu0 0.0
      %789 = vmatpush2.msra.mxu0 0.0
      %790 = vmatprep.mubr.f32.mxu0 0.0
      %791 = vmatmul.mubr.f32.gmra.mxu0 %v721
      %v792 = vpop.f32.mrf.mxu0
      %v793 = vadd.f32 %v712, %v792
      %v794 = vpop.f32.mrf.mxu0
      %795 = vmatprep.mubr.f32.mxu0 0.0
      %796 = vmatmul.mubr.f32.gmra.mxu0 %v724
      %v797 = vpop.f32.mrf.mxu0
      %v798 = vadd.f32 %v717, %v797
      %v799 = vpop.f32.mrf.mxu0
      %800 = vdwg.mxu0
      %v801 = vld [vmem:[%s4] sm:$0x1]
      %v803 = vlaneseq
      %v804 = vshrl.u32 %v803, 7
      %v805 = vsub.s32 0, %v804
      %v806 = vrot.slane %v801, %v805
      %v808 = vadd.f32 %v793, %v806
      %v809 = vadd.f32 %v798, %v806
      %v810 = vmax.f32 %v808, 0.0
      %v811 = vmax.f32 %v809, 0.0
      %v812 = vld [vmem:[%s5] sm:$0xf]
      %v813 = vld [vmem:[%s6] sm:$0x1]
      %v815 = vlaneseq
      %v816 = vshrl.u32 %v815, 7
      %v817 = vsub.s32 0, %v816
      %v818 = vrot.slane %v813, %v817
      %v821 = vsel %vm386, %v812, 0
      %823 = vmatprep.subr.mxu0 0.0
      %824 = vmatpush1.msra.mxu0 0.0
      %825 = vmatprep.subr.mxu0 0.0
      %826 = vmatpush1.msra.mxu0 0.0
      %827 = vmatprep.subr.mxu0 0.0
      %828 = vmatpush1.msra.mxu0 0.0
      %829 = vmatprep.subr.mxu0 0.0
      %830 = vmatpush1.msra.mxu0 0.0
      %831 = vmatprep.subr.mxu0 0.0
      %832 = vmatpush1.msra.mxu0 0.0
      %833 = vmatprep.subr.mxu0 0.0
      %834 = vmatpush1.msra.mxu0 0.0
      %835 = vmatprep.subr.mxu0 0.0
      %836 = vmatpush1.msra.mxu0 0.0
      %837 = vmatprep.subr.mxu0 0.0
      %838 = vmatpush1.msra.mxu0 0.0
      %839 = vmatprep.subr.mxu0 0.0
      %840 = vmatpush1.msra.mxu0 0.0
      %841 = vmatprep.subr.mxu0 0.0
      %842 = vmatpush1.msra.mxu0 0.0
      %843 = vmatprep.subr.mxu0 0.0
      %844 = vmatpush1.msra.mxu0 0.0
      %845 = vmatprep.subr.mxu0 0.0
      %846 = vmatpush1.msra.mxu0 0.0
      %847 = vmatprep.subr.mxu0 0.0
      %848 = vmatpush1.msra.mxu0 0.0
      %849 = vmatprep.subr.mxu0 0.0
      %850 = vmatpush1.msra.mxu0 0.0
      %851 = vmatprep.subr.mxu0 0.0
      %852 = vmatpush1.msra.mxu0 0.0
      %853 = vmatprep.subr.mxu0 0.0
      %854 = vmatpush1.msra.mxu0 %v821
      %855 = vmatprep.subr.mxu0 0.0
      %856 = vmatpush2.msra.mxu0 0.0
      %857 = vmatprep.subr.mxu0 0.0
      %858 = vmatpush2.msra.mxu0 0.0
      %859 = vmatprep.subr.mxu0 0.0
      %860 = vmatpush2.msra.mxu0 0.0
      %861 = vmatprep.subr.mxu0 0.0
      %862 = vmatpush2.msra.mxu0 0.0
      %863 = vmatprep.subr.mxu0 0.0
      %864 = vmatpush2.msra.mxu0 0.0
      %865 = vmatprep.subr.mxu0 0.0
      %866 = vmatpush2.msra.mxu0 0.0
      %867 = vmatprep.subr.mxu0 0.0
      %868 = vmatpush2.msra.mxu0 0.0
      %869 = vmatprep.subr.mxu0 0.0
      %870 = vmatpush2.msra.mxu0 0.0
      %871 = vmatprep.subr.mxu0 0.0
      %872 = vmatpush2.msra.mxu0 0.0
      %873 = vmatprep.subr.mxu0 0.0
      %874 = vmatpush2.msra.mxu0 0.0
      %875 = vmatprep.subr.mxu0 0.0
      %876 = vmatpush2.msra.mxu0 0.0
      %877 = vmatprep.subr.mxu0 0.0
      %878 = vmatpush2.msra.mxu0 0.0
      %879 = vmatprep.subr.mxu0 0.0
      %880 = vmatpush2.msra.mxu0 0.0
      %881 = vmatprep.subr.mxu0 0.0
      %882 = vmatpush2.msra.mxu0 0.0
      %883 = vmatprep.subr.mxu0 0.0
      %884 = vmatpush2.msra.mxu0 0.0
      %885 = vmatprep.subr.mxu0 0.0
      %886 = vmatpush2.msra.mxu0 0.0
      %887 = vmatprep.mubr.f32.mxu0 0.0
      %888 = vmatmul.mubr.f32.gmra.mxu0 %v381
      %v889 = vpop.f32.mrf.mxu0
      %v890 = vadd.f32 %v818, %v889
      %v891 = vpop.f32.mrf.mxu0
      %892 = vmatprep.mubr.f32.mxu0 0.0
      %893 = vmatmul.mubr.f32.gmra.mxu0 %v384
      %v894 = vpop.f32.mrf.mxu0
      %v895 = vadd.f32 %v818, %v894
      %v896 = vpop.f32.mrf.mxu0
      %897 = vdwg.mxu0
      %v898 = vadd.f32 %v810, %v890
      %v899 = vadd.f32 %v811, %v895
      %v900 = vmax.f32 %v898, 0.0
      %v901 = vmax.f32 %v899, 0.0
      %902 = vst.msk [vmem:[%s278] sm:$0xff] %vm638, %v900
      %903 = vst.msk [vmem:[%s278 + $0x8] sm:$0xff] %vm638, %v901
      %p904 = scmp.lt.s32.totalorder %s18, 1
      %s905 = scalar_select %p904, %s18, 1
      %s906 = smul.addr %s905, 2
      %s907 = smul.addr %s906, 8
      %s908 = scalar_lea.vmem %s7, %s907
      // Predicated region
      $region49: #{tpu_custom_call.1} parent=47 // pred_check
        %p909 = pneg %p188
      $region50: #{tpu_custom_call.1} parent=47 // pred_check_branch
        %911 = sbr.rel (%p909) target = $region52
      $region51: #{tpu_custom_call.1} parent=47 // pred_region
        _
      $region52: #{tpu_custom_call.1} parent=47 // pred_fallthru
        _
    $region48: #{tpu_custom_call.1} parent=5 // pred_fallthru
      _
    %p912 = scmp.le.s32.totalorder 2, %s13
    // Predicated region
    $region53: #{tpu_custom_call.1} parent=5 // pred_check
      %p913 = pneg %p912
    $region54: #{tpu_custom_call.1} parent=5 // pred_check_branch
      %915 = sbr.rel (%p913) target = $region56
    $region55: #{tpu_custom_call.1} parent=5 // pred_region
      %s916 = ssub.s32 %s13, 2
      // Predicated region
      $region57: #{tpu_custom_call.1} parent=55 // pred_check
        %p917 = pneg %p194
      $region58: #{tpu_custom_call.1} parent=55 // pred_check_branch
        %919 = sbr.rel (%p917) target = $region60
      $region59: #{tpu_custom_call.1} parent=55 // pred_region
        %p920 = scmp.lt.s32.totalorder %s19, 1
        %s921 = scalar_select %p920, %s19, 1
        %s922 = smul.addr %s921, 2
        %s923 = smul.addr %s922, 8
        %s924 = scalar_lea.vmem %s7, %s923
      $region60: #{tpu_custom_call.1} parent=55 // pred_fallthru
        _
    $region56: #{tpu_custom_call.1} parent=5 // pred_fallthru
      _
  $region6: #{tpu_custom_call.1} parent=0 // loop_footer
    %s17 = sadd.s32 1, %s13
  $region7: #{tpu_custom_call.1} parent=0 // loop_footer_branch
    %12 = sbr.rel target = $region3
  $region8: #{tpu_custom_call.1} parent=0 // loop_exit
    _

</llo_original>
